<compile_context>
chip_gen: v5e
topology: v5e:2x2
jax: 0.10.0
libtpu: 0.0.40
codegen_flags: <defaults>
</compile_context>

<pallas_src>
import functools
import math

import jax
import jax.numpy as jnp
from jax.experimental import pallas as pl
from jax.experimental.pallas import tpu as pltpu

BN_EPS = 1e-5
BN_SCALE = float(1.0 / math.sqrt(1.0 + BN_EPS))  # eval-mode BN, fresh stats
VMEM_LIMIT = 48 * 1024 * 1024  # peak per-call use ~10 MiB; v7x-safe (<64 MiB)
ACT_DTYPE = jnp.bfloat16


def _rup(x, m):
    return (x + m - 1) // m * m


def _as2(v):
    return (v, v) if isinstance(v, int) else tuple(v)


# --------------------------------------------------------------------------
# Pallas kernels
# --------------------------------------------------------------------------
def _mm_kernel(p_ref, w_ref, o_ref, *, relu):
    """Single-shot (full-K) matmul tile; f32 MXU accumulate, bf16 epilogue."""
    y = jnp.dot(p_ref[...], w_ref[...], preferred_element_type=jnp.float32)
    if relu:
        y = jnp.maximum(y, 0.0)
    o_ref[...] = y.astype(o_ref.dtype)


def _pallas_matmul(p, w, relu):
    """p: (M, K) bf16, w: (K, N) bf16 (unpadded).  Returns (M, N) bf16."""
    m, k = p.shape
    k2, n = w.shape
    assert k == k2
    mp0 = _rup(m, 16)                       # 16-row alignment (bf16 sublanes)
    if mp0 <= 512:
        tm = mp0                            # single M tile
    else:
        best = None                         # minimize padding waste; prefer
        for cand in (512, 256, 128):        # larger tile on ties
            waste = _rup(m, cand) - m
            if best is None or waste < best[0]:
                best = (waste, cand)
        tm = best[1]
    mp = _rup(m, tm)
    if mp != m:
        p = jnp.pad(p, ((0, mp - m), (0, 0)))
    out = pl.pallas_call(
        functools.partial(_mm_kernel, relu=relu),
        grid=(mp // tm,),
        in_specs=[
            pl.BlockSpec((tm, k), lambda i: (i, 0)),   # full-K LHS tile
            pl.BlockSpec((k, n), lambda i: (0, 0)),    # weight resident
        ],
        out_specs=pl.BlockSpec((tm, n), lambda i: (i, 0)),
        out_shape=jax.ShapeDtypeStruct((mp, n), ACT_DTYPE),
        compiler_params=pltpu.CompilerParams(
            dimension_semantics=("parallel",),
            vmem_limit_bytes=VMEM_LIMIT),
    )(p, w)
    return out[:m] if mp != m else out


def _maxpool3_kernel(x_ref, o_ref):
    """3x3 stride-1 max over shifted taps (single read of the activation)."""
    ho = o_ref.shape[1]
    wo = o_ref.shape[2]
    m = x_ref[:, 0:ho, 0:wo, :]
    for dy in range(3):
        for dx in range(3):
            if dy == 0 and dx == 0:
                continue
            m = jnp.maximum(m, x_ref[:, dy:dy + ho, dx:dx + wo, :])
    o_ref[...] = m


@jax.jit
def maxpool3x3_s2(x):
    """MaxPool2d(kernel=3, stride=2, padding=0): Pallas stride-1 max (bf16),
    then a cheap XLA stride-2 subsample."""
    n, h, w, c = x.shape
    h1, w1 = h - 2, w - 2
    m = pl.pallas_call(
        _maxpool3_kernel,
        grid=(n,),
        in_specs=[pl.BlockSpec((1, h, w, c), lambda i: (i, 0, 0, 0))],
        out_specs=pl.BlockSpec((1, h1, w1, c), lambda i: (i, 0, 0, 0)),
        out_shape=jax.ShapeDtypeStruct((n, h1, w1, c), x.dtype),
        compiler_params=pltpu.CompilerParams(
            dimension_semantics=("parallel",),
            vmem_limit_bytes=VMEM_LIMIT),
    )(x)
    return m[:, ::2, ::2, :]


def _avgpool3_kernel(x_ref, o_ref):
    """3x3 stride-1 avg (input pre-padded by 1, count_include_pad=True)."""
    ho = o_ref.shape[1]
    wo = o_ref.shape[2]
    acc = x_ref[:, 0:ho, 0:wo, :].astype(jnp.float32)
    for dy in range(3):
        for dx in range(3):
            if dy == 0 and dx == 0:
                continue
            acc = acc + x_ref[:, dy:dy + ho, dx:dx + wo, :].astype(jnp.float32)
    o_ref[...] = (acc * (1.0 / 9.0)).astype(o_ref.dtype)


@jax.jit
def avgpool3x3_s1_p1(x):
    """AvgPool2d(3, stride=1, padding=1), PyTorch default count_include_pad."""
    n, h, w, c = x.shape
    xp = jnp.pad(x, ((0, 0), (1, 1), (1, 1), (0, 0)))
    return pl.pallas_call(
        _avgpool3_kernel,
        grid=(n,),
        in_specs=[pl.BlockSpec((1, h + 2, w + 2, c), lambda i: (i, 0, 0, 0))],
        out_specs=pl.BlockSpec((1, h, w, c), lambda i: (i, 0, 0, 0)),
        out_shape=jax.ShapeDtypeStruct((n, h, w, c), x.dtype),
        compiler_params=pltpu.CompilerParams(
            dimension_semantics=("parallel",),
            vmem_limit_bytes=VMEM_LIMIT),
    )(xp)


def _gap_kernel(x_ref, o_ref, *, inv):
    o_ref[...] = (jnp.sum(x_ref[...].astype(jnp.float32), axis=1)
                  * inv).astype(o_ref.dtype)


@jax.jit
def global_avg_pool(x):
    """AdaptiveAvgPool2d((1,1)) + Flatten -> (N, C) bf16."""
    n, h, w, c = x.shape
    xr = x.reshape(n, h * w, c)
    return pl.pallas_call(
        functools.partial(_gap_kernel, inv=1.0 / float(h * w)),
        grid=(1,),
        in_specs=[pl.BlockSpec((n, h * w, c), lambda i: (0, 0, 0))],
        out_specs=pl.BlockSpec((n, c), lambda i: (0, 0)),
        out_shape=jax.ShapeDtypeStruct((n, c), x.dtype),
        compiler_params=pltpu.CompilerParams(
            dimension_semantics=("arbitrary",),
            vmem_limit_bytes=VMEM_LIMIT),
    )(xr)


# --------------------------------------------------------------------------
# JAX glue: im2col + fused conv call
# --------------------------------------------------------------------------
def _im2col(x, kh, kw, sh, sw, ph, pw):
    n, h, w, c = x.shape
    ho = (h + 2 * ph - kh) // sh + 1
    wo = (w + 2 * pw - kw) // sw + 1
    if kh == 1 and kw == 1 and sh == 1 and sw == 1 and ph == 0 and pw == 0:
        return x.reshape(n * h * w, c), (n, ho, wo)
    xp = jnp.pad(x, ((0, 0), (ph, ph), (pw, pw), (0, 0)))
    cols = []
    for i in range(kh):
        for j in range(kw):
            cols.append(xp[:, i:i + ho * sh:sh, j:j + wo * sw:sw, :])
    p = jnp.stack(cols, axis=3)  # (n, ho, wo, kh*kw, c)
    return p.reshape(n * ho * wo, kh * kw * c), (n, ho, wo)


@functools.partial(jax.jit,
                   static_argnames=("kh", "kw", "sh", "sw", "ph", "pw", "relu"))
def _conv_impl(x, w, *, kh, kw, sh, sw, ph, pw, relu):
    patches, (n, ho, wo) = _im2col(x, kh, kw, sh, sw, ph, pw)  # bf16
    y = _pallas_matmul(patches, w, relu)                        # (M, N) bf16
    return y.reshape(n, ho, wo, w.shape[1])


def run_conv(x, layer):
    y = _conv_impl(x, layer["w"],
                   kh=layer["kh"], kw=layer["kw"],
                   sh=layer["s"][0], sw=layer["s"][1],
                   ph=layer["p"][0], pw=layer["p"][1],
                   relu=layer["relu"])
    splits = layer["splits"]
    if splits is None:
        return y
    outs, off = [], 0
    for c in splits:
        outs.append(y[..., off:off + c])
        off += c
    return tuple(outs)


# --------------------------------------------------------------------------
# Deterministic parameter construction (weights pre-folded, bf16, unpadded)
# --------------------------------------------------------------------------
class KeyGen:
    def __init__(self, seed=0):
        self.key = jax.random.PRNGKey(seed)

    def __call__(self):
        self.key, k = jax.random.split(self.key)
        return k


KG = KeyGen(0)


def _w_hwio(kh, kw, cin, cout):
    std = math.sqrt(2.0 / (kh * kw * cin))
    return std * jax.random.normal(KG(), (kh, kw, cin, cout), jnp.float32)


def _pack(mats, kh, kw, s, p, relu, splits=None):
    # mats: list of (K, cout) f32 matrices sharing the same K (fused along N).
    wcat = mats[0] if len(mats) == 1 else jnp.concatenate(mats, axis=1)
    return {"w": wcat.astype(jnp.bfloat16), "kh": kh, "kw": kw,
            "s": _as2(s), "p": _as2(p), "relu": relu, "splits": splits}


def convblock(cin, cout, k, s, p):
    # ConvBlock = Conv(bias=0) + eval-BN (folded scale) + ReLU.
    kh, kw = _as2(k)
    w = _w_hwio(kh, kw, cin, cout) * BN_SCALE
    return _pack([w.reshape(kh * kw * cin, cout)], kh, kw, s, p, relu=True)


def conv_plain(cin, cout, k, s, p):
    # Plain nn.Conv2d (no BN / ReLU), zero bias.
    kh, kw = _as2(k)
    w = _w_hwio(kh, kw, cin, cout)
    return _pack([w.reshape(kh * kw * cin, cout)], kh, kw, s, p, relu=False)


def conv1x1_group(cin, couts, relu=False, bn=False):
    # Fuse several same-input 1x1 convs into one wide matmul (concat along N).
    mats = []
    for c in couts:
        w = _w_hwio(1, 1, cin, c)
        if bn:
            w = w * BN_SCALE
        mats.append(w.reshape(cin, c))
    return _pack(mats, 1, 1, 1, 0, relu=relu, splits=tuple(couts))


def _embed_3x3(w):
    kh, kw, cin, cout = w.shape
    e = jnp.zeros((3, 3, cin, cout), jnp.float32)
    oy, ox = (3 - kh) // 2, (3 - kw) // 2
    return e.at[oy:oy + kh, ox:ox + kw, :, :].set(w)


def conv_pair_3x3(cin, k1, c1, k2, c2):
    # Fuse two same-input (1,3)/(3,1) convs into one 3x3 matmul by zero-
    # embedding their taps; output slab kept unsplit (concatenated directly).
    kh1, kw1 = _as2(k1)
    kh2, kw2 = _as2(k2)
    m1 = _embed_3x3(_w_hwio(kh1, kw1, cin, c1)).reshape(9 * cin, c1)
    m2 = _embed_3x3(_w_hwio(kh2, kw2, cin, c2)).reshape(9 * cin, c2)
    return _pack([m1, m2], 3, 3, 1, 1, relu=False, splits=None)


# --------------------------------------------------------------------------
# Inception-v4 modules
# --------------------------------------------------------------------------
def make_stem(cin):
    return {
        "step": [convblock(cin, 32, 3, 2, 0),
                 convblock(32, 32, 3, 1, 0),
                 convblock(32, 64, 3, 1, 1)],
        "b1_2": convblock(64, 96, 3, 2, 0),
        # branch2_1[0] + branch2_2[0] (both 1x1 ConvBlocks on the same input)
        "b2_in": conv1x1_group(160, (64, 64), relu=True, bn=True),
        "b2_1": [convblock(64, 96, 3, 1, 0)],
        "b2_2": [convblock(64, 64, (7, 1), 1, (3, 0)),
                 convblock(64, 64, (1, 7), 1, (0, 3)),
                 convblock(64, 96, 3, 1, 0)],
        "b3_1": convblock(192, 192, 3, 2, 0),
    }


def stem_fwd(p, x):
    for c in p["step"]:
        x = run_conv(x, c)
    x = jnp.concatenate([maxpool3x3_s2(x), run_conv(x, p["b1_2"])], axis=-1)
    xi, xj = run_conv(x, p["b2_in"])
    for c in p["b2_1"]:
        xi = run_conv(xi, c)
    for c in p["b2_2"]:
        xj = run_conv(xj, c)
    x = jnp.concatenate([xi, xj], axis=-1)
    x = jnp.concatenate([run_conv(x, p["b3_1"]), maxpool3x3_s2(x)], axis=-1)
    return x


def make_inceptionA():
    # c1x1 fuses: branch_1's 1x1 (pre-pool, exact commute), branch_2,
    # branch_3 head, branch_4 head.
    return {
        "c1x1": conv1x1_group(384, (96, 96, 64, 64)),
        "b3": conv_plain(64, 96, 3, 1, 1),
        "b4": [conv_plain(64, 96, 3, 1, 1), conv_plain(96, 96, 3, 1, 1)],
    }


def inceptionA_fwd(p, x):
    x1h, x2, x3, x4 = run_conv(x, p["c1x1"])
    x1 = avgpool3x3_s1_p1(x1h)        # conv1x1(avgpool(x)) == avgpool(conv1x1(x))
    x3 = run_conv(x3, p["b3"])
    for c in p["b4"]:
        x4 = run_conv(x4, c)
    return jnp.concatenate([x1, x2, x3, x4], axis=-1)


def make_reductionA():
    return {
        "b2": convblock(384, 384, 3, 2, 0),
        "b3": [convblock(384, 192, 1, 1, 0), convblock(192, 224, 3, 1, 1),
               convblock(224, 256, 3, 2, 0)],
    }


def reductionA_fwd(p, x):
    x1 = maxpool3x3_s2(x)
    x2 = run_conv(x, p["b2"])
    x3 = x
    for c in p["b3"]:
        x3 = run_conv(x3, c)
    return jnp.concatenate([x1, x2, x3], axis=-1)


def make_inceptionB():
    return {
        "c1x1": conv1x1_group(1024, (128, 384, 192, 192)),
        "b3": [conv_plain(192, 224, (1, 7), 1, (0, 3)),
               conv_plain(224, 256, (7, 1), 1, (3, 0))],
        "b4": [conv_plain(192, 192, (1, 7), 1, (0, 3)),
               conv_plain(192, 224, (7, 1), 1, (3, 0)),
               conv_plain(224, 224, (1, 7), 1, (0, 3)),
               conv_plain(224, 256, (7, 1), 1, (3, 0))],
    }


def inceptionB_fwd(p, x):
    x1h, x2, x3, x4 = run_conv(x, p["c1x1"])
    x1 = avgpool3x3_s1_p1(x1h)
    for c in p["b3"]:
        x3 = run_conv(x3, c)
    for c in p["b4"]:
        x4 = run_conv(x4, c)
    return jnp.concatenate([x1, x2, x3, x4], axis=-1)


def make_reductionB():
    return {
        # branch_2[0] + branch_3[0] (both 1x1 ConvBlocks on the same input)
        "c1x1": conv1x1_group(1024, (192, 256), relu=True, bn=True),
        "b2": [convblock(192, 192, 3, 2, 0)],
        "b3": [convblock(256, 256, (1, 7), 1, (0, 3)),
               convblock(256, 320, (7, 1), 1, (3, 0)),
               convblock(320, 320, 3, 2, 0)],
    }


def reductionB_fwd(p, x):
    x1 = maxpool3x3_s2(x)
    x2, x3 = run_conv(x, p["c1x1"])
    for c in p["b2"]:
        x2 = run_conv(x2, c)
    for c in p["b3"]:
        x3 = run_conv(x3, c)
    return jnp.concatenate([x1, x2, x3], axis=-1)


def make_inceptionC():
    return {
        # branch_1 head (pre-pool), branch_2, branch_3, branch_4 head
        "c1x1": conv1x1_group(1536, (256, 256, 384, 384)),
        "b3_pair": conv_pair_3x3(384, (1, 3), 256, (3, 1), 256),  # b3_1 | b3_2
        "b4": [conv_plain(384, 448, (1, 3), 1, (0, 1)),
               conv_plain(448, 512, (3, 1), 1, (1, 0))],
        "b4_pair": conv_pair_3x3(512, (3, 1), 256, (1, 3), 256),  # b4_1 | b4_2
    }


def inceptionC_fwd(p, x):
    x1h, x2, x3, x4 = run_conv(x, p["c1x1"])
    x1 = avgpool3x3_s1_p1(x1h)
    x3slab = run_conv(x3, p["b3_pair"])   # unsplit: [x3_1 | x3_2]
    for c in p["b4"]:
        x4 = run_conv(x4, c)
    x4slab = run_conv(x4, p["b4_pair"])   # unsplit: [x4_1 | x4_2]
    return jnp.concatenate([x1, x2, x3slab, x4slab], axis=-1)


def make_inceptionv4(blocks, in_channels=3, num_classes=10):
    params = {
        "stem": make_stem(in_channels),
        "incA": [make_inceptionA() for _ in range(blocks[0])],
        "redA": make_reductionA(),
        "incB": [make_inceptionB() for _ in range(blocks[1])],
        "redB": make_reductionB(),
        "incC": [make_inceptionC() for _ in range(blocks[2])],
    }
    std = math.sqrt(2.0 / 1536)
    fcw = std * jax.random.normal(KG(), (1536, num_classes), jnp.float32)
    params["fc"] = _pack([fcw], 1, 1, 1, 0, relu=False)  # Linear (zero bias)
    return params


def inceptionv4_fwd(params, x_nchw):
    x = jnp.transpose(x_nchw, (0, 2, 3, 1)).astype(ACT_DTYPE)  # NCHW -> NHWC bf16
    x = stem_fwd(params["stem"], x)
    for p in params["incA"]:
        x = inceptionA_fwd(p, x)
    x = reductionA_fwd(params["redA"], x)
    for p in params["incB"]:
        x = inceptionB_fwd(p, x)
    x = reductionB_fwd(params["redB"], x)
    for p in params["incC"]:
        x = inceptionC_fwd(p, x)
    feat = global_avg_pool(x)  # (N, 1536) bf16
    # Dropout(p=0.2): eval-mode identity.
    logits = _pallas_matmul(feat, params["fc"]["w"], relu=False)
    return logits.astype(jnp.float32)


if __name__ == "__main__":
    # Smallest spatial size keeping every stride-2 / valid-conv stage legal for
    # this architecture is 75x75 (final feature map is 1536 @ 1x1).
    key = jax.random.PRNGKey(0)
    x = jax.random.normal(key, (2, 3, 75, 75), jnp.float32)  # NCHW, like PyTorch

    params = make_inceptionv4(blocks=[1, 1, 1], in_channels=3, num_classes=10)
    fwd = jax.jit(functools.partial(inceptionv4_fwd, params))
    out = jax.block_until_ready(fwd(x))
    assert out.shape == (2, 10), out.shape
    assert bool(jnp.all(jnp.isfinite(out)))
    print("KERNEL_OK")
</pallas_src>

<mosaic_0001>
module attributes {stable_mosaic.version = 11 : i64} {
  func.func @_mm_kernel(%arg0: i32, %arg1: memref<256x27xbf16, #tpu.memory_space<vmem>>, %arg2: memref<27x32xbf16, #tpu.memory_space<vmem>>, %arg3: memref<256x32xbf16, #tpu.memory_space<vmem>>) attributes {dimension_semantics = [#tpu.dimension_semantics<parallel>], iteration_bounds = array<i64: 11>, scalar_prefetch = 0 : i64, scratch_operands = 0 : i64, tpu.core_type = #tpu.core_type<tc>, window_params = [{transform_indices = @transform_0, window_bounds = array<i64: 256, 27>}, {pipeline_mode = #tpu.pipeline_mode<synchronous>, transform_indices = @transform_1, window_bounds = array<i64: 27, 32>}, {transform_indices = @transform_2, window_bounds = array<i64: 256, 32>}]} {
    %c0 = arith.constant 0 : index
    %c0_0 = arith.constant 0 : index
    %0 = vector.load %arg1[%c0, %c0_0] : memref<256x27xbf16, #tpu.memory_space<vmem>>, vector<256x27xbf16>
    %c0_1 = arith.constant 0 : index
    %c0_2 = arith.constant 0 : index
    %1 = vector.load %arg2[%c0_1, %c0_2] : memref<27x32xbf16, #tpu.memory_space<vmem>>, vector<27x32xbf16>
    %cst = arith.constant dense<0.000000e+00> : vector<256x32xf32>
    %2 = tpu.matmul %0, %1, %cst {dimension_numbers = #tpu.dot_dimension_numbers<[1], [0], [0], [1], [0, 0, 1, 1], [], []>} : vector<256x27xbf16>, vector<27x32xbf16>, vector<256x32xf32> -> vector<256x32xf32>
    %cst_3 = arith.constant 0.000000e+00 : f32
    %3 = vector.broadcast %cst_3 : f32 to vector<256x32xf32>
    %4 = arith.maximumf %2, %3 : vector<256x32xf32>
    %5 = arith.truncf %4 : vector<256x32xf32> to vector<256x32xbf16>
    %c0_4 = arith.constant 0 : index
    %c0_5 = arith.constant 0 : index
    %6 = vector.load %arg3[%c0_4, %c0_5] : memref<256x32xbf16, #tpu.memory_space<vmem>>, vector<256x32xbf16>
    tpu.vector_store %arg3[%c0_4, %c0_5], %5 {strides = array<i32>} : memref<256x32xbf16, #tpu.memory_space<vmem>>, vector<256x32xbf16>,
    return
  }
  func.func @transform_0(%arg0: i32) -> (i32, i32) {
    %c0_i32 = arith.constant 0 : i32
    %c0_i32_0 = arith.constant 0 : i32
    return %arg0, %c0_i32 : i32, i32
  }
  func.func @transform_1(%arg0: i32) -> (i32, i32) {
    %c0_i32 = arith.constant 0 : i32
    %c0_i32_0 = arith.constant 0 : i32
    %c0_i32_1 = arith.constant 0 : i32
    return %c0_i32, %c0_i32_0 : i32, i32
  }
  func.func @transform_2(%arg0: i32) -> (i32, i32) {
    %c0_i32 = arith.constant 0 : i32
    %c0_i32_0 = arith.constant 0 : i32
    return %arg0, %c0_i32 : i32, i32
  }
}

</mosaic_0001>

<llo_original>
// kernel: _conv_impl.1
$region0: #{_conv_impl.1}
  #allocation0 [shape = 'u32[]', space=smem, size = 0x4, offset = 0x4, fixed_abs, tag = 'smem constant byte address 0x4 - core index']
  #allocation1 [shape = 'u32[72,128]{1,0:T(1,128)}', space=vmem, size = 0x9000, scoped, tag = 'internal scratch']
  %s0 = inlined_call_operand.vmem [shape: bf16[2816,27], index: 0, kind: input, shape index: {}]
  %s1 = inlined_call_operand.vmem [shape: bf16[27,32], index: 1, kind: input, shape index: {}]
  %s2 = inlined_call_operand.vmem [shape: bf16[2816,32], index: 2, kind: output, shape index: {}]
  %s3 = sld [smem:[#allocation0]]
  $region41: #{_conv_impl.1} parent=0
    _
  %s5 = ssub.s32 1, %s3
  %s6 = scalar_select 0, %s5, %s3
  loop: start=0, step=1, limit=13
  $region2: #{_conv_impl.1} parent=0 // loop_pre_header
    _
  $region3: #{_conv_impl.1} parent=0 // loop_header
    %s8 = sphi 0, %s12
    %p9 = scmp.ge.s32.totalorder %s8, 13
    %s18 = sphi 0, %s20
    %s21 = sphi 0, %s18
    %s22 = sphi 0, %s21
    %s38 = sphi 0, %s22
    %s42 = sphi 0, %s42
    %s44 = sphi 0, %s42
    %s45 = sphi 0, %s44
    %s59 = sphi 0, %s45
    %s65 = sphi 0, %s67
    %s68 = sphi 0, %s65
    %s69 = sphi 0, %s68
    %s85 = sphi 0, %s69
  $region4: #{_conv_impl.1} parent=0 // loop_header_branch
    %11 = sbr.rel (%p9) target = $region8
  $region5: #{_conv_impl.1} parent=0 // loop_body
    %s13 = ssub.s32 %s8, 1
    %s14 = ssub.s32 %s8, 2
    %s15 = sadd.s32 %s8, 1
    %s16 = ssub.s32 %s8, %s15
    %p17 = scmp.eq.s32.totalorder %s16, 0
    %s19 = sadd.s32 %s18, 1
    %s20 = scalar_select %p17, %s18, %s19
    %p23 = pneg %p17
    %p24 = scmp.eq.s32.totalorder %s8, 10
    %p25 = por %p23, %p24
    %p26 = scmp.ne.s32.totalorder %s18, %s21
    %p27 = scmp.eq.s32.totalorder %s8, 0
    %p28 = por %p26, %p27
    %p29 = scmp.ne.s32.totalorder %s18, %s21
    %p30 = scmp.eq.s32.totalorder %s13, 10
    %p31 = por %p29, %p30
    %p32 = scmp.ne.s32.totalorder %s21, %s22
    %p33 = scmp.eq.s32.totalorder %s13, 0
    %p34 = por %p32, %p33
    %p35 = scmp.ne.s32.totalorder %s21, %s22
    %p36 = scmp.eq.s32.totalorder %s14, 10
    %p37 = por %p35, %p36
    %p39 = scmp.ne.s32.totalorder %s22, %s38
    %p40 = scmp.eq.s32.totalorder %s14, 0
    %p41 = por %p39, %p40
    %s43 = sadd.s32 %s42, 1
    %p46 = scmp.eq.s32.totalorder %s8, 10
    %p47 = scmp.ne.s32.totalorder %s42, %s44
    %p48 = scmp.eq.s32.totalorder %s8, 0
    %p49 = por %p47, %p48
    %p50 = scmp.ne.s32.totalorder %s42, %s44
    %p51 = scmp.eq.s32.totalorder %s13, 10
    %p52 = por %p50, %p51
    %p53 = scmp.ne.s32.totalorder %s44, %s45
    %p54 = scmp.eq.s32.totalorder %s13, 0
    %p55 = por %p53, %p54
    %p56 = scmp.ne.s32.totalorder %s44, %s45
    %p57 = scmp.eq.s32.totalorder %s14, 10
    %p58 = por %p56, %p57
    %p60 = scmp.ne.s32.totalorder %s45, %s59
    %p61 = scmp.eq.s32.totalorder %s14, 0
    %p62 = por %p60, %p61
    %s63 = ssub.s32 %s8, %s15
    %p64 = scmp.eq.s32.totalorder %s63, 0
    %s66 = sadd.s32 %s65, 1
    %s67 = scalar_select %p64, %s65, %s66
    %p70 = pneg %p64
    %p71 = scmp.eq.s32.totalorder %s8, 10
    %p72 = por %p70, %p71
    %p73 = scmp.ne.s32.totalorder %s65, %s68
    %p74 = scmp.eq.s32.totalorder %s8, 0
    %p75 = por %p73, %p74
    %p76 = scmp.ne.s32.totalorder %s65, %s68
    %p77 = scmp.eq.s32.totalorder %s13, 10
    %p78 = por %p76, %p77
    %p79 = scmp.ne.s32.totalorder %s68, %s69
    %p80 = scmp.eq.s32.totalorder %s13, 0
    %p81 = por %p79, %p80
    %p82 = scmp.ne.s32.totalorder %s68, %s69
    %p83 = scmp.eq.s32.totalorder %s14, 10
    %p84 = por %p82, %p83
    %p86 = scmp.ne.s32.totalorder %s69, %s85
    %p87 = scmp.eq.s32.totalorder %s14, 0
    %p88 = por %p86, %p87
    %p89 = scmp.le.s32.totalorder 1, %s8
    %p90 = scmp.lt.s32.totalorder %s8, 12
    %p91 = pnand %p89, %p90
    %p92 = pneg %p91
    // Predicated region
    $region9: #{_conv_impl.1} parent=5 // pred_check
      _
    $region10: #{_conv_impl.1} parent=5 // pred_check_branch
      %94 = sbr.rel (%p91) target = $region12
    $region11: #{_conv_impl.1} parent=5 // pred_region
      %s95 = ssub.s32 %s8, 1
      // Predicated region
      $region13: #{_conv_impl.1} parent=11 // pred_check
        %p96 = pneg %p55
      $region14: #{_conv_impl.1} parent=11 // pred_check_branch
        %98 = sbr.rel (%p96) target = $region16
      $region15: #{_conv_impl.1} parent=11 // pred_region
        _
      $region16: #{_conv_impl.1} parent=11 // pred_fallthru
        _
    $region12: #{_conv_impl.1} parent=5 // pred_fallthru
      _
    %p99 = scmp.lt.s32.totalorder %s8, 11
    // Predicated region
    $region17: #{_conv_impl.1} parent=5 // pred_check
      %p100 = pneg %p99
    $region18: #{_conv_impl.1} parent=5 // pred_check_branch
      %102 = sbr.rel (%p100) target = $region20
    $region19: #{_conv_impl.1} parent=5 // pred_region
      // Predicated region
      $region21: #{_conv_impl.1} parent=19 // pred_check
        %p103 = pneg %p28
      $region22: #{_conv_impl.1} parent=19 // pred_check_branch
        %105 = sbr.rel (%p103) target = $region24
      $region23: #{_conv_impl.1} parent=19 // pred_region
        %s106 = smul.u32 32, %s8
        %p107 = scmp.lt.s32.totalorder %s106, 351
        %s108 = scalar_select %p107, %s106, 351
        %s109 = smul.addr %s108, 4
        %s110 = scalar_lea.vmem %s0, %s109
        %s111 = smul.u32 32, %s8
      $region24: #{_conv_impl.1} parent=19 // pred_fallthru
        _
    $region20: #{_conv_impl.1} parent=5 // pred_fallthru
      _
    %p112 = scmp.le.s32.totalorder 1, %s8
    %p113 = scmp.lt.s32.totalorder %s8, 12
    %p114 = pnand %p112, %p113
    %p115 = pneg %p114
    // Predicated region
    $region25: #{_conv_impl.1} parent=5 // pred_check
      _
    $region26: #{_conv_impl.1} parent=5 // pred_check_branch
      %117 = sbr.rel (%p114) target = $region28
    $region27: #{_conv_impl.1} parent=5 // pred_region
      %s118 = ssub.s32 %s8, 1
      %s119 = smul.u32 32, %s13
      %p120 = scmp.lt.s32.totalorder %s119, 351
      %s121 = scalar_select %p120, %s119, 351
      %s122 = smul.addr %s121, 4
      %s123 = scalar_lea.vmem %s0, %s122
      %p124 = pneg %p34
      %p125 = pneg %p31
      %p126 = pneg %p55
      %p127 = pneg %p52
      %p128 = pneg %p81
      %p129 = pneg %p78
      %s130 = smul.u32 32, %s13
      %p131 = scmp.lt.s32.totalorder %s130, 351
      %s132 = scalar_select %p131, %s130, 351
      %s133 = smul.addr %s132, 4
      %s134 = scalar_lea.vmem %s2, %s133
      %s135 = smul.u32 32, %s13
      %p136 = scmp.lt.s32.totalorder %s135, 351
      %s137 = scalar_select %p136, %s135, 351
      %s138 = smul.addr %s137, 4
      %s139 = scalar_lea.vmem %s0, %s138
      %s140 = smul.u32 32, %s13
      %s141 = smul.u32 32, %s13
      %p142 = scmp.lt.s32.totalorder %s141, 351
      %s143 = scalar_select %p142, %s141, 351
      %s144 = smul.addr %s143, 4
      %s145 = scalar_lea.vmem %s2, %s144
      %s146 = smul.u32 32, %s13
      %v148 = vld [vmem:[%s139] sm:$0xf]
      %v149 = vld [vmem:[%s139 + $0x4] sm:$0xf]
      %v150 = vld [vmem:[%s139 + $0x8] sm:$0xf]
      %v151 = vld [vmem:[%s139 + $0xc] sm:$0xf]
      %v152 = vld [vmem:[%s139 + $0x10] sm:$0xf]
      %v153 = vld [vmem:[%s139 + $0x14] sm:$0xf]
      %v154 = vld [vmem:[%s139 + $0x18] sm:$0xf]
      %v155 = vld [vmem:[%s139 + $0x1c] sm:$0xf]
      %v156 = vld [vmem:[%s139 + $0x20] sm:$0xf]
      %v157 = vld [vmem:[%s139 + $0x24] sm:$0xf]
      %v158 = vld [vmem:[%s139 + $0x28] sm:$0xf]
      %v159 = vld [vmem:[%s139 + $0x2c] sm:$0xf]
      %v160 = vld [vmem:[%s139 + $0x30] sm:$0xf]
      %v161 = vld [vmem:[%s139 + $0x34] sm:$0xf]
      %v162 = vld [vmem:[%s139 + $0x38] sm:$0xf]
      %v163 = vld [vmem:[%s139 + $0x3c] sm:$0xf]
      %v164 = vld [vmem:[%s139 + $0x40] sm:$0xf]
      %v165 = vld [vmem:[%s139 + $0x44] sm:$0xf]
      %v166 = vld [vmem:[%s139 + $0x48] sm:$0xf]
      %v167 = vld [vmem:[%s139 + $0x4c] sm:$0xf]
      %v168 = vld [vmem:[%s139 + $0x50] sm:$0xf]
      %v169 = vld [vmem:[%s139 + $0x54] sm:$0xf]
      %v170 = vld [vmem:[%s139 + $0x58] sm:$0xf]
      %v171 = vld [vmem:[%s139 + $0x5c] sm:$0xf]
      %v172 = vld [vmem:[%s139 + $0x60] sm:$0xf]
      %v173 = vld [vmem:[%s139 + $0x64] sm:$0xf]
      %v174 = vld [vmem:[%s139 + $0x68] sm:$0xf]
      %v175 = vld [vmem:[%s139 + $0x6c] sm:$0xf]
      %v176 = vld [vmem:[%s139 + $0x70] sm:$0xf]
      %v177 = vld [vmem:[%s139 + $0x74] sm:$0xf]
      %v178 = vld [vmem:[%s139 + $0x78] sm:$0xf]
      %v179 = vld [vmem:[%s139 + $0x7c] sm:$0xf]
      %v180 = vld [vmem:[%s1] sm:$0xf]
      %v181 = vld [vmem:[%s1 + $0x4] sm:$0xf]
      %v182 = vld [vmem:[%s1 + $0x8] sm:$0xf]
      %v183 = vld [vmem:[%s1 + $0xc] sm:$0x3]
      %v216 = vunpack.c.l.b16 %v148
      %v217 = vunpack.c.l.b16 %v149
      %v218 = vunpack.c.l.b16 %v150
      %v219 = vunpack.c.l.b16 %v151
      %v220 = vunpack.c.l.b16 %v152
      %v221 = vunpack.c.l.b16 %v153
      %v222 = vunpack.c.l.b16 %v154
      %v223 = vunpack.c.l.b16 %v155
      %v224 = vunpack.c.l.b16 %v156
      %v225 = vunpack.c.l.b16 %v157
      %v226 = vunpack.c.l.b16 %v158
      %v227 = vunpack.c.l.b16 %v159
      %v228 = vunpack.c.l.b16 %v160
      %v229 = vunpack.c.l.b16 %v161
      %v230 = vunpack.c.l.b16 %v162
      %v231 = vunpack.c.l.b16 %v163
      %v232 = vunpack.c.l.b16 %v164
      %v233 = vunpack.c.l.b16 %v165
      %v234 = vunpack.c.l.b16 %v166
      %v235 = vunpack.c.l.b16 %v167
      %v236 = vunpack.c.l.b16 %v168
      %v237 = vunpack.c.l.b16 %v169
      %v238 = vunpack.c.l.b16 %v170
      %v239 = vunpack.c.l.b16 %v171
      %v240 = vunpack.c.l.b16 %v172
      %v241 = vunpack.c.l.b16 %v173
      %v242 = vunpack.c.l.b16 %v174
      %v243 = vunpack.c.l.b16 %v175
      %v244 = vunpack.c.l.b16 %v176
      %v245 = vunpack.c.l.b16 %v177
      %v246 = vunpack.c.l.b16 %v178
      %v247 = vunpack.c.l.b16 %v179
      %v248 = vpack.c.b16 %v217, %v216
      %v249 = vpack.c.b16 %v219, %v218
      %v250 = vpack.c.b16 %v221, %v220
      %v251 = vpack.c.b16 %v223, %v222
      %v252 = vpack.c.b16 %v225, %v224
      %v253 = vpack.c.b16 %v227, %v226
      %v254 = vpack.c.b16 %v229, %v228
      %v255 = vpack.c.b16 %v231, %v230
      %v256 = vpack.c.b16 %v233, %v232
      %v257 = vpack.c.b16 %v235, %v234
      %v258 = vpack.c.b16 %v237, %v236
      %v259 = vpack.c.b16 %v239, %v238
      %v260 = vpack.c.b16 %v241, %v240
      %v261 = vpack.c.b16 %v243, %v242
      %v262 = vpack.c.b16 %v245, %v244
      %v263 = vpack.c.b16 %v247, %v246
      %v268 = vunpack.c.l.b16 %v180
      %v269 = vunpack.c.l.b16 %v181
      %v270 = vunpack.c.l.b16 %v182
      %v271 = vunpack.c.l.b16 %v183
      %v272 = vpack.c.b16 %v269, %v268
      %v273 = vpack.c.b16 %v271, %v270
      %vm275 = vcmask 220160
      %v277 = vsel %vm275, %v248, 0
      %v280 = vsel %vm275, %v249, 0
      %v283 = vsel %vm275, %v250, 0
      %v286 = vsel %vm275, %v251, 0
      %v289 = vsel %vm275, %v252, 0
      %v292 = vsel %vm275, %v253, 0
      %v295 = vsel %vm275, %v254, 0
      %v298 = vsel %vm275, %v255, 0
      %v301 = vsel %vm275, %v256, 0
      %v304 = vsel %vm275, %v257, 0
      %v307 = vsel %vm275, %v258, 0
      %v310 = vsel %vm275, %v259, 0
      %v313 = vsel %vm275, %v260, 0
      %v316 = vsel %vm275, %v261, 0
      %v319 = vsel %vm275, %v262, 0
      %v322 = vsel %vm275, %v263, 0
      %vm324 = vcmask 1044480
      %vm325 = vcmask 1045504
      %v326 = vsel %vm324, 4294967295, 65535
      %v327 = vsel %vm325, %v326, 0
      %v329 = vand.u32 %v273, %v327
      %331 = vmatpush.bf16.msra.mxu0 0
      %332 = vmatpush.bf16.msra.mxu0 0
      %333 = vmatpush.bf16.msra.mxu0 0
      %334 = vmatpush.bf16.msra.mxu0 0
      %335 = vmatpush.bf16.msra.mxu0 0
      %336 = vmatpush.bf16.msra.mxu0 0
      %337 = vmatpush.bf16.msra.mxu0 %v329
      %338 = vmatpush.bf16.msra.mxu0 %v272
      %339 = vmatmul.bf16.gmra.mxu0 %v277
      %v340 = vpop.f32.mrf.mxu0
      %v341 = vadd.f32 0.0, %v340
      %v342 = vpop.f32.mrf.mxu0
      %v343 = vadd.f32 0.0, %v342
      %344 = vmatmul.bf16.gmra.mxu0 %v280
      %v345 = vpop.f32.mrf.mxu0
      %v346 = vadd.f32 0.0, %v345
      %v347 = vpop.f32.mrf.mxu0
      %v348 = vadd.f32 0.0, %v347
      %349 = vmatmul.bf16.gmra.mxu0 %v283
      %v350 = vpop.f32.mrf.mxu0
      %v351 = vadd.f32 0.0, %v350
      %v352 = vpop.f32.mrf.mxu0
      %v353 = vadd.f32 0.0, %v352
      %354 = vmatmul.bf16.gmra.mxu0 %v286
      %v355 = vpop.f32.mrf.mxu0
      %v356 = vadd.f32 0.0, %v355
      %v357 = vpop.f32.mrf.mxu0
      %v358 = vadd.f32 0.0, %v357
      %359 = vmatmul.bf16.gmra.mxu0 %v289
      %v360 = vpop.f32.mrf.mxu0
      %v361 = vadd.f32 0.0, %v360
      %v362 = vpop.f32.mrf.mxu0
      %v363 = vadd.f32 0.0, %v362
      %364 = vmatmul.bf16.gmra.mxu0 %v292
      %v365 = vpop.f32.mrf.mxu0
      %v366 = vadd.f32 0.0, %v365
      %v367 = vpop.f32.mrf.mxu0
      %v368 = vadd.f32 0.0, %v367
      %369 = vmatmul.bf16.gmra.mxu0 %v295
      %v370 = vpop.f32.mrf.mxu0
      %v371 = vadd.f32 0.0, %v370
      %v372 = vpop.f32.mrf.mxu0
      %v373 = vadd.f32 0.0, %v372
      %374 = vmatmul.bf16.gmra.mxu0 %v298
      %v375 = vpop.f32.mrf.mxu0
      %v376 = vadd.f32 0.0, %v375
      %v377 = vpop.f32.mrf.mxu0
      %v378 = vadd.f32 0.0, %v377
      %379 = vmatmul.bf16.gmra.mxu0 %v301
      %v380 = vpop.f32.mrf.mxu0
      %v381 = vadd.f32 0.0, %v380
      %v382 = vpop.f32.mrf.mxu0
      %v383 = vadd.f32 0.0, %v382
      %384 = vmatmul.bf16.gmra.mxu0 %v304
      %v385 = vpop.f32.mrf.mxu0
      %v386 = vadd.f32 0.0, %v385
      %v387 = vpop.f32.mrf.mxu0
      %v388 = vadd.f32 0.0, %v387
      %389 = vmatmul.bf16.gmra.mxu0 %v307
      %v390 = vpop.f32.mrf.mxu0
      %v391 = vadd.f32 0.0, %v390
      %v392 = vpop.f32.mrf.mxu0
      %v393 = vadd.f32 0.0, %v392
      %394 = vmatmul.bf16.gmra.mxu0 %v310
      %v395 = vpop.f32.mrf.mxu0
      %v396 = vadd.f32 0.0, %v395
      %v397 = vpop.f32.mrf.mxu0
      %v398 = vadd.f32 0.0, %v397
      %399 = vmatmul.bf16.gmra.mxu0 %v313
      %v400 = vpop.f32.mrf.mxu0
      %v401 = vadd.f32 0.0, %v400
      %v402 = vpop.f32.mrf.mxu0
      %v403 = vadd.f32 0.0, %v402
      %404 = vmatmul.bf16.gmra.mxu0 %v316
      %v405 = vpop.f32.mrf.mxu0
      %v406 = vadd.f32 0.0, %v405
      %v407 = vpop.f32.mrf.mxu0
      %v408 = vadd.f32 0.0, %v407
      %409 = vmatmul.bf16.gmra.mxu0 %v319
      %v410 = vpop.f32.mrf.mxu0
      %v411 = vadd.f32 0.0, %v410
      %v412 = vpop.f32.mrf.mxu0
      %v413 = vadd.f32 0.0, %v412
      %414 = vmatmul.bf16.gmra.mxu0 %v322
      %v415 = vpop.f32.mrf.mxu0
      %v416 = vadd.f32 0.0, %v415
      %v417 = vpop.f32.mrf.mxu0
      %v418 = vadd.f32 0.0, %v417
      %419 = vdwg.mxu0
      %v420 = vmax.f32 %v341, 0.0
      %v421 = vmax.f32 %v343, 0.0
      %v422 = vmax.f32 %v346, 0.0
      %v423 = vmax.f32 %v348, 0.0
      %v424 = vmax.f32 %v351, 0.0
      %v425 = vmax.f32 %v353, 0.0
      %v426 = vmax.f32 %v356, 0.0
      %v427 = vmax.f32 %v358, 0.0
      %v428 = vmax.f32 %v361, 0.0
      %v429 = vmax.f32 %v363, 0.0
      %v430 = vmax.f32 %v366, 0.0
      %v431 = vmax.f32 %v368, 0.0
      %v432 = vmax.f32 %v371, 0.0
      %v433 = vmax.f32 %v373, 0.0
      %v434 = vmax.f32 %v376, 0.0
      %v435 = vmax.f32 %v378, 0.0
      %v436 = vmax.f32 %v381, 0.0
      %v437 = vmax.f32 %v383, 0.0
      %v438 = vmax.f32 %v386, 0.0
      %v439 = vmax.f32 %v388, 0.0
      %v440 = vmax.f32 %v391, 0.0
      %v441 = vmax.f32 %v393, 0.0
      %v442 = vmax.f32 %v396, 0.0
      %v443 = vmax.f32 %v398, 0.0
      %v444 = vmax.f32 %v401, 0.0
      %v445 = vmax.f32 %v403, 0.0
      %v446 = vmax.f32 %v406, 0.0
      %v447 = vmax.f32 %v408, 0.0
      %v448 = vmax.f32 %v411, 0.0
      %v449 = vmax.f32 %v413, 0.0
      %v450 = vmax.f32 %v416, 0.0
      %v451 = vmax.f32 %v418, 0.0
      %v452 = vpack.c.bf16 %v420, %v420
      %v453 = vpack.c.bf16 %v421, %v421
      %v454 = vpack.c.bf16 %v422, %v422
      %v455 = vpack.c.bf16 %v423, %v423
      %v456 = vpack.c.bf16 %v424, %v424
      %v457 = vpack.c.bf16 %v425, %v425
      %v458 = vpack.c.bf16 %v426, %v426
      %v459 = vpack.c.bf16 %v427, %v427
      %v460 = vpack.c.bf16 %v428, %v428
      %v461 = vpack.c.bf16 %v429, %v429
      %v462 = vpack.c.bf16 %v430, %v430
      %v463 = vpack.c.bf16 %v431, %v431
      %v464 = vpack.c.bf16 %v432, %v432
      %v465 = vpack.c.bf16 %v433, %v433
      %v466 = vpack.c.bf16 %v434, %v434
      %v467 = vpack.c.bf16 %v435, %v435
      %v468 = vpack.c.bf16 %v436, %v436
      %v469 = vpack.c.bf16 %v437, %v437
      %v470 = vpack.c.bf16 %v438, %v438
      %v471 = vpack.c.bf16 %v439, %v439
      %v472 = vpack.c.bf16 %v440, %v440
      %v473 = vpack.c.bf16 %v441, %v441
      %v474 = vpack.c.bf16 %v442, %v442
      %v475 = vpack.c.bf16 %v443, %v443
      %v476 = vpack.c.bf16 %v444, %v444
      %v477 = vpack.c.bf16 %v445, %v445
      %v478 = vpack.c.bf16 %v446, %v446
      %v479 = vpack.c.bf16 %v447, %v447
      %v480 = vpack.c.bf16 %v448, %v448
      %v481 = vpack.c.bf16 %v449, %v449
      %v482 = vpack.c.bf16 %v450, %v450
      %v483 = vpack.c.bf16 %v451, %v451
      %vm484 = vcmask 257024
      %485 = vst.msk [vmem:[%s145] sm:$0xf] %vm484, %v452
      %486 = vst.msk [vmem:[%s145 + $0x4] sm:$0xf] %vm484, %v453
      %487 = vst.msk [vmem:[%s145 + $0x8] sm:$0xf] %vm484, %v454
      %488 = vst.msk [vmem:[%s145 + $0xc] sm:$0xf] %vm484, %v455
      %489 = vst.msk [vmem:[%s145 + $0x10] sm:$0xf] %vm484, %v456
      %490 = vst.msk [vmem:[%s145 + $0x14] sm:$0xf] %vm484, %v457
      %491 = vst.msk [vmem:[%s145 + $0x18] sm:$0xf] %vm484, %v458
      %492 = vst.msk [vmem:[%s145 + $0x1c] sm:$0xf] %vm484, %v459
      %493 = vst.msk [vmem:[%s145 + $0x20] sm:$0xf] %vm484, %v460
      %494 = vst.msk [vmem:[%s145 + $0x24] sm:$0xf] %vm484, %v461
      %495 = vst.msk [vmem:[%s145 + $0x28] sm:$0xf] %vm484, %v462
      %496 = vst.msk [vmem:[%s145 + $0x2c] sm:$0xf] %vm484, %v463
      %497 = vst.msk [vmem:[%s145 + $0x30] sm:$0xf] %vm484, %v464
      %498 = vst.msk [vmem:[%s145 + $0x34] sm:$0xf] %vm484, %v465
      %499 = vst.msk [vmem:[%s145 + $0x38] sm:$0xf] %vm484, %v466
      %500 = vst.msk [vmem:[%s145 + $0x3c] sm:$0xf] %vm484, %v467
      %501 = vst.msk [vmem:[%s145 + $0x40] sm:$0xf] %vm484, %v468
      %502 = vst.msk [vmem:[%s145 + $0x44] sm:$0xf] %vm484, %v469
      %503 = vst.msk [vmem:[%s145 + $0x48] sm:$0xf] %vm484, %v470
      %504 = vst.msk [vmem:[%s145 + $0x4c] sm:$0xf] %vm484, %v471
      %505 = vst.msk [vmem:[%s145 + $0x50] sm:$0xf] %vm484, %v472
      %506 = vst.msk [vmem:[%s145 + $0x54] sm:$0xf] %vm484, %v473
      %507 = vst.msk [vmem:[%s145 + $0x58] sm:$0xf] %vm484, %v474
      %508 = vst.msk [vmem:[%s145 + $0x5c] sm:$0xf] %vm484, %v475
      %509 = vst.msk [vmem:[%s145 + $0x60] sm:$0xf] %vm484, %v476
      %510 = vst.msk [vmem:[%s145 + $0x64] sm:$0xf] %vm484, %v477
      %511 = vst.msk [vmem:[%s145 + $0x68] sm:$0xf] %vm484, %v478
      %512 = vst.msk [vmem:[%s145 + $0x6c] sm:$0xf] %vm484, %v479
      %513 = vst.msk [vmem:[%s145 + $0x70] sm:$0xf] %vm484, %v480
      %514 = vst.msk [vmem:[%s145 + $0x74] sm:$0xf] %vm484, %v481
      %515 = vst.msk [vmem:[%s145 + $0x78] sm:$0xf] %vm484, %v482
      %516 = vst.msk [vmem:[%s145 + $0x7c] sm:$0xf] %vm484, %v483
      %s517 = smul.u32 32, %s13
      %p518 = scmp.lt.s32.totalorder %s517, 351
      %s519 = scalar_select %p518, %s517, 351
      %s520 = smul.addr %s519, 4
      %s521 = scalar_lea.vmem %s2, %s520
      // Predicated region
      $region29: #{_conv_impl.1} parent=27 // pred_check
        %p522 = pneg %p78
      $region30: #{_conv_impl.1} parent=27 // pred_check_branch
        %524 = sbr.rel (%p522) target = $region32
      $region31: #{_conv_impl.1} parent=27 // pred_region
        %s525 = smul.u32 32, %s13
      $region32: #{_conv_impl.1} parent=27 // pred_fallthru
        _
    $region28: #{_conv_impl.1} parent=5 // pred_fallthru
      _
    %p526 = scmp.le.s32.totalorder 2, %s8
    // Predicated region
    $region33: #{_conv_impl.1} parent=5 // pred_check
      %p527 = pneg %p526
    $region34: #{_conv_impl.1} parent=5 // pred_check_branch
      %529 = sbr.rel (%p527) target = $region36
    $region35: #{_conv_impl.1} parent=5 // pred_region
      %s530 = ssub.s32 %s8, 2
      // Predicated region
      $region37: #{_conv_impl.1} parent=35 // pred_check
        %p531 = pneg %p84
      $region38: #{_conv_impl.1} parent=35 // pred_check_branch
        %533 = sbr.rel (%p531) target = $region40
      $region39: #{_conv_impl.1} parent=35 // pred_region
        %s534 = smul.u32 32, %s14
        %p535 = scmp.lt.s32.totalorder %s534, 351
        %s536 = scalar_select %p535, %s534, 351
        %s537 = smul.addr %s536, 4
        %s538 = scalar_lea.vmem %s2, %s537
      $region40: #{_conv_impl.1} parent=35 // pred_fallthru
        _
    $region36: #{_conv_impl.1} parent=5 // pred_fallthru
      _
  $region6: #{_conv_impl.1} parent=0 // loop_footer
    %s12 = sadd.s32 1, %s8
  $region7: #{_conv_impl.1} parent=0 // loop_footer_branch
    %7 = sbr.rel target = $region3
  $region8: #{_conv_impl.1} parent=0 // loop_exit
    _

</llo_original>
